<compile_context>
chip_gen: v5e
topology: v5e:2x2
jax: 0.10.0
libtpu: 0.0.40
codegen_flags: <defaults>
</compile_context>

<pallas_src>
import functools
import math

import jax
import jax.numpy as jnp
from jax.experimental import pallas as pl
from jax.experimental.pallas import tpu as pltpu


def _label_smoothing_kernel(pred_ref, tgt_ref, out_ref, *,
                            confidence, eps, padding_idx, const_term):
    x = pred_ref[...].astype(jnp.float32)                  # (TN, V)
    tgt = tgt_ref[...]                                     # (TN, 1) int32
    v = x.shape[1]

    # (1, V) column iota; broadcasts against (TN, 1) target in the compares below.
    col = jax.lax.broadcasted_iota(jnp.int32, (1, v), 1)

    # Row-wise logsumexp.
    m = jnp.max(x, axis=1, keepdims=True)
    lse = m + jnp.log(jnp.sum(jnp.exp(x - m), axis=1, keepdims=True))

    # Sum of logits over the (full, unpadded) vocab.
    sum_x = jnp.sum(x, axis=1, keepdims=True)

    # x[row, target[row]] and x[row, padding_idx] via compare + select (no gather).
    x_t = jnp.sum(jnp.where(col == tgt, x, 0.0), axis=1, keepdims=True)
    x_p = jnp.sum(jnp.where(col == padding_idx, x, 0.0), axis=1, keepdims=True)

    # Closed-form label-smoothed KL per row (only meaningful where target != padding_idx,
    # which is exactly the set kept by the select below).
    kl_row = (const_term + lse
              - (confidence - eps) * x_t
              - eps * sum_x
              + eps * x_p)                                 # (TN, 1)

    keep = tgt != padding_idx                              # (TN, 1) bool
    # Select (not multiply) so NaN/Inf from undefined rows of a partial last block
    # cannot leak into the block sums.
    block_num = jnp.sum(jnp.where(keep, kl_row, 0.0))
    block_den = jnp.sum(keep.astype(jnp.float32))

    # Pack (num, den) into one full vreg: sublane 0 = num, sublane 1 = den.
    row = jax.lax.broadcasted_iota(jnp.int32, (8, 128), 0)
    packed = jnp.where(row == 0, block_num,
                       jnp.where(row == 1, block_den, 0.0)).astype(jnp.float32)
    out_ref[...] = packed[None]


def _vmem_budget():
    """Return (vmem_limit_bytes, pipeline_budget_bytes), generation-aware."""
    cap = None
    try:
        cap = getattr(pltpu.get_tpu_info(), "vmem_capacity_bytes", None)
    except Exception:
        cap = None
    if cap is None or cap <= 0:
        cap = 64 * 1024 * 1024            # assume the tightest case (v7x: 64 MiB / TC)
    if cap >= 100 * 1024 * 1024:          # v5e / v6e: 128 MiB physical VMEM
        return 96 * 1024 * 1024, 72 * 1024 * 1024
    return 48 * 1024 * 1024, 36 * 1024 * 1024


def _pick_row_tile(n_rows, v, itemsize, sublane, budget):
    cdiv = lambda a, b: -(-a // b)
    # Per pred element: double-buffered input (2 * itemsize) + one live f32 tile for
    # the upcast / exp temporaries (+4) + slack for reduction temporaries (+4).
    per_elem = 2 * itemsize + 8
    rt = budget // (per_elem * v)
    rt = max(sublane, (rt // sublane) * sublane)
    rt = min(rt, 4096)
    # Keep >= ~4 row blocks so the "parallel" grid axis can shard across v7x's two
    # TensorCores (and the pipeline has enough steps to overlap on 1-TC chips).
    tile_for_blocks = max(sublane, cdiv(cdiv(n_rows, 4), sublane) * sublane)
    rt = min(rt, tile_for_blocks)
    n_round = cdiv(n_rows, sublane) * sublane
    return min(rt, n_round)


def label_smoothing_loss(pred, target, vocab_size, padding_idx, smoothing=0.1,
                         row_tile=None):
    """pred: (B, S, V) float, target: (B, S) int -> scalar loss (float32)."""
    B, S, V = pred.shape
    assert V == vocab_size
    N = B * S
    cdiv = lambda a, b: -(-a // b)

    itemsize = jnp.dtype(pred.dtype).itemsize
    sublane = {4: 8, 2: 16, 1: 32}.get(itemsize, 8)

    vmem_limit, budget = _vmem_budget()

    n_round = cdiv(N, sublane) * sublane
    if row_tile is None:
        row_tile = _pick_row_tile(N, V, itemsize, sublane, budget)
    else:
        row_tile = max(sublane, (row_tile // sublane) * sublane)
        row_tile = min(row_tile, n_round)

    num_blocks = cdiv(N, row_tile)
    Np = num_blocks * row_tile

    # pred is NOT padded (no HBM copy); the last row block may be partial.
    pred2d = pred.reshape(N, V)

    # Pad only the tiny target vector so undefined rows of a partial pred block are
    # guaranteed to carry target == padding_idx (and thus get dropped by the mask).
    tgt = target.reshape(N).astype(jnp.int32)
    if Np != N:
        tgt = jnp.pad(tgt, (0, Np - N), constant_values=padding_idx)
    tgt2d = tgt.reshape(Np, 1)

    confidence = 1.0 - smoothing
    eps = smoothing / (vocab_size - 2)
    const_term = 0.0
    if confidence > 0.0:
        const_term += confidence * math.log(confidence)
    if eps > 0.0:
        const_term += (vocab_size - 2) * eps * math.log(eps)

    kernel = functools.partial(
        _label_smoothing_kernel, confidence=confidence, eps=eps,
        padding_idx=padding_idx, const_term=const_term)

    out = pl.pallas_call(
        kernel,
        out_shape=jax.ShapeDtypeStruct((num_blocks, 8, 128), jnp.float32),
        grid_spec=pltpu.PrefetchScalarGridSpec(
            num_scalar_prefetch=0,
            grid=(num_blocks,),
            in_specs=[
                pl.BlockSpec((row_tile, V), lambda i: (i, 0)),   # full-V block, no pad
                pl.BlockSpec((row_tile, 1), lambda i: (i, 0)),
            ],
            out_specs=pl.BlockSpec((1, 8, 128), lambda i: (i, 0, 0)),
        ),
        compiler_params=pltpu.CompilerParams(
            dimension_semantics=("parallel",),
            vmem_limit_bytes=vmem_limit,
        ),
        cost_estimate=pl.CostEstimate(
            flops=int(7 * N * V),
            transcendentals=int(N * V),
            bytes_accessed=int(N * V * itemsize + Np * 4 + num_blocks * 8 * 128 * 4),
        ),
    )(pred2d, tgt2d)

    num = jnp.sum(out[:, 0, 0])
    den = jnp.sum(out[:, 1, 0])
    return num / den


def _reference(pred, target, vocab_size, padding_idx, smoothing=0.1):
    # Pure-JAX reference mirroring the PyTorch module.
    B, S, V = pred.shape
    pred = pred.reshape(-1, V).astype(jnp.float32)
    target = target.reshape(-1)
    eps = smoothing / (V - 2)
    confidence = 1.0 - smoothing
    true_dist = jnp.full_like(pred, eps)
    true_dist = true_dist.at[jnp.arange(pred.shape[0]), target].set(confidence)
    true_dist = true_dist.at[:, padding_idx].set(0.0)
    logp = jax.nn.log_softmax(pred, axis=1)
    log_td = jnp.log(jnp.where(true_dist > 0, true_dist, 1.0))
    kl = jnp.sum(true_dist * (log_td - logp), axis=1)
    mask = (target != padding_idx).astype(jnp.float32)
    return jnp.sum(kl * mask) / jnp.sum(mask)


if __name__ == "__main__":
    PAD_IDX = 0
    key = jax.random.PRNGKey(0)

    # (B, S, V, forced_row_tile or None)
    cases = [
        (2, 8, 32, None),    # tiny vocab, V not a multiple of 128 (full-V block)
        (3, 5, 256, None),   # N = 15 -> exercises the partial last row block + mask
        (4, 16, 128, 8),     # forced small tile -> many "parallel" partial-sum blocks
    ]
    for idx, (B, S, V, rt) in enumerate(cases):
        key, kp, kt = jax.random.split(key, 3)
        pred = jax.random.normal(kp, (B, S, V), dtype=jnp.float32)
        target = jax.random.randint(kt, (B, S), 0, V, dtype=jnp.int32)
        # Force a few padding positions so the mask actually does something.
        target = target.at[0, 0].set(PAD_IDX)
        target = target.at[B - 1, S - 1].set(PAD_IDX)

        loss = label_smoothing_loss(pred, target, V, PAD_IDX,
                                    smoothing=0.1, row_tile=rt)
        loss = jax.block_until_ready(loss)
        ref = _reference(pred, target, V, PAD_IDX, smoothing=0.1)
        assert jnp.allclose(loss, ref, atol=1e-4, rtol=1e-4), (idx, loss, ref)

    print("KERNEL_OK")
</pallas_src>

<mosaic_0001>
module attributes {stable_mosaic.version = 11 : i64} {
  func.func @_label_smoothing_kernel(%arg0: i32, %arg1: memref<8x32xf32, #tpu.memory_space<vmem>>, %arg2: memref<8x1xi32, #tpu.memory_space<vmem>>, %arg3: memref<1x8x128xf32, #tpu.memory_space<vmem>>) attributes {dimension_semantics = [#tpu.dimension_semantics<parallel>], iteration_bounds = array<i64: 2>, scalar_prefetch = 0 : i64, scratch_operands = 0 : i64, tpu.core_type = #tpu.core_type<tc>, window_params = [{transform_indices = @transform_0, window_bounds = array<i64: 8, 32>}, {transform_indices = @transform_1, window_bounds = array<i64: 8, 1>}, {transform_indices = @transform_2, window_bounds = array<i64: 1, 8, 128>}]} {
    %c0 = arith.constant 0 : index
    %c0_0 = arith.constant 0 : index
    %0 = vector.load %arg1[%c0, %c0_0] : memref<8x32xf32, #tpu.memory_space<vmem>>, vector<8x32xf32>
    %c0_1 = arith.constant 0 : index
    %c0_2 = arith.constant 0 : index
    %1 = vector.load %arg2[%c0_1, %c0_2] : memref<8x1xi32, #tpu.memory_space<vmem>>, vector<8x1xi32>
    %2 = tpu.iota {dimensions = array<i32: 1>} : vector<1x32xi32>
    %cst = arith.constant dense<0xFF800000> : vector<8xf32>
    %3 = vector.multi_reduction <maximumf>, %0, %cst [1] : vector<8x32xf32> to vector<8xf32>
    %4 = vector.shape_cast %3 : vector<8xf32> to vector<8x1xf32>
    %5 = vector.broadcast %4 : vector<8x1xf32> to vector<8x32xf32>
    %6 = arith.subf %0, %5 : vector<8x32xf32>
    %7 = math.exp %6 : vector<8x32xf32>
    %cst_3 = arith.constant dense<0.000000e+00> : vector<8xf32>
    %8 = vector.multi_reduction <add>, %7, %cst_3 [1] : vector<8x32xf32> to vector<8xf32>
    %9 = vector.shape_cast %8 : vector<8xf32> to vector<8x1xf32>
    %10 = math.log %9 : vector<8x1xf32>
    %11 = arith.addf %4, %10 : vector<8x1xf32>
    %cst_4 = arith.constant dense<0.000000e+00> : vector<8xf32>
    %12 = vector.multi_reduction <add>, %0, %cst_4 [1] : vector<8x32xf32> to vector<8xf32>
    %13 = vector.shape_cast %12 : vector<8xf32> to vector<8x1xf32>
    %14 = vector.broadcast %2 : vector<1x32xi32> to vector<8x32xi32>
    %15 = vector.broadcast %1 : vector<8x1xi32> to vector<8x32xi32>
    %16 = arith.cmpi eq, %14, %15 : vector<8x32xi32>
    %cst_5 = arith.constant 0.000000e+00 : f32
    %17 = vector.broadcast %cst_5 : f32 to vector<8x32xf32>
    %18 = arith.select %16, %0, %17 : vector<8x32xi1>, vector<8x32xf32>
    %cst_6 = arith.constant dense<0.000000e+00> : vector<8xf32>
    %19 = vector.multi_reduction <add>, %18, %cst_6 [1] : vector<8x32xf32> to vector<8xf32>
    %20 = vector.shape_cast %19 : vector<8xf32> to vector<8x1xf32>
    %c0_i32 = arith.constant 0 : i32
    %21 = vector.broadcast %c0_i32 : i32 to vector<1x32xi32>
    %22 = arith.cmpi eq, %2, %21 : vector<1x32xi32>
    %cst_7 = arith.constant 0.000000e+00 : f32
    %23 = vector.shape_cast %22 : vector<1x32xi1> to vector<1x32xi1>
    %24 = vector.broadcast %23 : vector<1x32xi1> to vector<8x32xi1>
    %25 = vector.broadcast %cst_7 : f32 to vector<8x32xf32>
    %26 = arith.select %24, %0, %25 : vector<8x32xi1>, vector<8x32xf32>
    %cst_8 = arith.constant dense<0.000000e+00> : vector<8xf32>
    %27 = vector.multi_reduction <add>, %26, %cst_8 [1] : vector<8x32xf32> to vector<8xf32>
    %28 = vector.shape_cast %27 : vector<8xf32> to vector<8x1xf32>
    %cst_9 = arith.constant -0.665202737 : f32
    %29 = vector.broadcast %cst_9 : f32 to vector<8x1xf32>
    %30 = arith.addf %29, %11 : vector<8x1xf32>
    %cst_10 = arith.constant 0.896666646 : f32
    %31 = vector.broadcast %cst_10 : f32 to vector<8x1xf32>
    %32 = arith.mulf %31, %20 : vector<8x1xf32>
    %33 = arith.subf %30, %32 : vector<8x1xf32>
    %cst_11 = arith.constant 0.00333333341 : f32
    %34 = vector.broadcast %cst_11 : f32 to vector<8x1xf32>
    %35 = arith.mulf %34, %13 : vector<8x1xf32>
    %36 = arith.subf %33, %35 : vector<8x1xf32>
    %cst_12 = arith.constant 0.00333333341 : f32
    %37 = vector.broadcast %cst_12 : f32 to vector<8x1xf32>
    %38 = arith.mulf %37, %28 : vector<8x1xf32>
    %39 = arith.addf %36, %38 : vector<8x1xf32>
    %c0_i32_13 = arith.constant 0 : i32
    %40 = vector.broadcast %c0_i32_13 : i32 to vector<8x1xi32>
    %41 = arith.cmpi ne, %1, %40 : vector<8x1xi32>
    %cst_14 = arith.constant 0.000000e+00 : f32
    %42 = vector.broadcast %cst_14 : f32 to vector<8x1xf32>
    %43 = arith.select %41, %39, %42 : vector<8x1xi1>, vector<8x1xf32>
    %44 = vector.shape_cast %43 : vector<8x1xf32> to vector<1x8x1xf32>
    %cst_15 = arith.constant dense<0.000000e+00> : vector<1xf32>
    %45 = vector.multi_reduction <add>, %44, %cst_15 [1, 2] : vector<1x8x1xf32> to vector<1xf32>
    %46 = vector.shape_cast %45 : vector<1xf32> to vector<1x1x1xf32>
    %47 = vector.extract %46[0, 0, 0] : f32 from vector<1x1x1xf32>
    %48 = arith.extui %41 : vector<8x1xi1> to vector<8x1xi32>
    %49 = arith.sitofp %48 : vector<8x1xi32> to vector<8x1xf32>
    %50 = vector.shape_cast %49 : vector<8x1xf32> to vector<1x8x1xf32>
    %cst_16 = arith.constant dense<0.000000e+00> : vector<1xf32>
    %51 = vector.multi_reduction <add>, %50, %cst_16 [1, 2] : vector<1x8x1xf32> to vector<1xf32>
    %52 = vector.shape_cast %51 : vector<1xf32> to vector<1x1x1xf32>
    %53 = vector.extract %52[0, 0, 0] : f32 from vector<1x1x1xf32>
    %54 = tpu.iota {dimensions = array<i32: 0>} : vector<8x128xi32>
    %c0_i32_17 = arith.constant 0 : i32
    %55 = vector.broadcast %c0_i32_17 : i32 to vector<8x128xi32>
    %56 = arith.cmpi eq, %54, %55 : vector<8x128xi32>
    %c1_i32 = arith.constant 1 : i32
    %57 = vector.broadcast %c1_i32 : i32 to vector<8x128xi32>
    %58 = arith.cmpi eq, %54, %57 : vector<8x128xi32>
    %cst_18 = arith.constant 0.000000e+00 : f32
    %59 = vector.broadcast %53 : f32 to vector<8x128xf32>
    %60 = vector.broadcast %cst_18 : f32 to vector<8x128xf32>
    %61 = arith.select %58, %59, %60 : vector<8x128xi1>, vector<8x128xf32>
    %62 = vector.broadcast %47 : f32 to vector<8x128xf32>
    %63 = arith.select %56, %62, %61 : vector<8x128xi1>, vector<8x128xf32>
    %64 = vector.shape_cast %63 : vector<8x128xf32> to vector<1x8x128xf32>
    %c0_19 = arith.constant 0 : index
    %c0_20 = arith.constant 0 : index
    %c0_21 = arith.constant 0 : index
    %65 = vector.load %arg3[%c0_19, %c0_20, %c0_21] : memref<1x8x128xf32, #tpu.memory_space<vmem>>, vector<1x8x128xf32>
    tpu.vector_store %arg3[%c0_19, %c0_20, %c0_21], %64 {strides = array<i32>} : memref<1x8x128xf32, #tpu.memory_space<vmem>>, vector<1x8x128xf32>,
    return
  }
  func.func @transform_0(%arg0: i32) -> (i32, i32) {
    %c0_i32 = arith.constant 0 : i32
    %c0_i32_0 = arith.constant 0 : i32
    return %arg0, %c0_i32 : i32, i32
  }
  func.func @transform_1(%arg0: i32) -> (i32, i32) {
    %c0_i32 = arith.constant 0 : i32
    %c0_i32_0 = arith.constant 0 : i32
    return %arg0, %c0_i32 : i32, i32
  }
  func.func @transform_2(%arg0: i32) -> (i32, i32, i32) {
    %c0_i32 = arith.constant 0 : i32
    %c0_i32_0 = arith.constant 0 : i32
    %c0_i32_1 = arith.constant 0 : i32
    return %arg0, %c0_i32, %c0_i32_0 : i32, i32, i32
  }
}

</mosaic_0001>

<llo_original>
// kernel: tpu_custom_call.1
$region0: #{tpu_custom_call.1}
  #allocation0 [shape = 'u32[]', space=smem, size = 0x4, offset = 0x4, fixed_abs, tag = 'smem constant byte address 0x4 - core index']
  #allocation1 [shape = 'u32[72,128]{1,0:T(1,128)}', space=vmem, size = 0x9000, scoped, tag = 'internal scratch']
  %s0 = inlined_call_operand.vmem [shape: f32[16,32], index: 0, kind: input, shape index: {}]
  %s1 = inlined_call_operand.vmem [shape: s32[16,1], index: 1, kind: input, shape index: {}]
  %s2 = inlined_call_operand.hbm [shape: f32[2,8,128], index: 2, kind: output, shape index: {}]
  %s3 = sld [smem:[#allocation0]]
  $region41: #{tpu_custom_call.1} parent=0
    _
  %s5 = ssub.s32 1, %s3
  %s6 = scalar_select 0, %s5, %s3
  $region1: #{tpu_custom_call.1} parent=0
    #allocation2 [shape = 'u8[8192]{0}', space=vmem, size = 0x2000, scoped, tag = 'output window, operand 0']
    #allocation3 [shape = 's32[2]{0}', space=sflag, size = 0x8, scoped, tag = 'scoped memory for tpu_custom_call.1']
    %7 = vsyncpa [#allocation3], 0
    %s8 = scalar_lea.sflag [#allocation3], 1
    %9 = vsyncpa %s8, 0
    loop: start=0, step=1, limit=4
    $region2: #{tpu_custom_call.1} parent=1 // loop_pre_header
      _
    $region3: #{tpu_custom_call.1} parent=1 // loop_header
      %s11 = sphi 0, %s15
      %p12 = scmp.ge.s32.totalorder %s11, 4
      %s21 = sphi 0, %s23
      %s24 = sphi 0, %s21
      %s25 = sphi 0, %s24
      %s41 = sphi 0, %s25
      %s47 = sphi 0, %s49
      %s50 = sphi 0, %s47
      %s51 = sphi 0, %s50
      %s67 = sphi 0, %s51
      %s73 = sphi 0, %s75
      %s76 = sphi 0, %s73
      %s77 = sphi 0, %s76
      %s93 = sphi 0, %s77
    $region4: #{tpu_custom_call.1} parent=1 // loop_header_branch
      %14 = sbr.rel (%p12) target = $region8
    $region5: #{tpu_custom_call.1} parent=1 // loop_body
      %s16 = ssub.s32 %s11, 1
      %s17 = ssub.s32 %s11, 2
      %s18 = sadd.s32 %s11, 1
      %s19 = ssub.s32 %s11, %s18
      %p20 = scmp.eq.s32.totalorder %s19, 0
      %s22 = sadd.s32 %s21, 1
      %s23 = scalar_select %p20, %s21, %s22
      %p26 = pneg %p20
      %p27 = scmp.eq.s32.totalorder %s11, 1
      %p28 = por %p26, %p27
      %p29 = scmp.ne.s32.totalorder %s21, %s24
      %p30 = scmp.eq.s32.totalorder %s11, 0
      %p31 = por %p29, %p30
      %p32 = scmp.ne.s32.totalorder %s21, %s24
      %p33 = scmp.eq.s32.totalorder %s16, 1
      %p34 = por %p32, %p33
      %p35 = scmp.ne.s32.totalorder %s24, %s25
      %p36 = scmp.eq.s32.totalorder %s16, 0
      %p37 = por %p35, %p36
      %p38 = scmp.ne.s32.totalorder %s24, %s25
      %p39 = scmp.eq.s32.totalorder %s17, 1
      %p40 = por %p38, %p39
      %p42 = scmp.ne.s32.totalorder %s25, %s41
      %p43 = scmp.eq.s32.totalorder %s17, 0
      %p44 = por %p42, %p43
      %s45 = ssub.s32 %s11, %s18
      %p46 = scmp.eq.s32.totalorder %s45, 0
      %s48 = sadd.s32 %s47, 1
      %s49 = scalar_select %p46, %s47, %s48
      %p52 = pneg %p46
      %p53 = scmp.eq.s32.totalorder %s11, 1
      %p54 = por %p52, %p53
      %p55 = scmp.ne.s32.totalorder %s47, %s50
      %p56 = scmp.eq.s32.totalorder %s11, 0
      %p57 = por %p55, %p56
      %p58 = scmp.ne.s32.totalorder %s47, %s50
      %p59 = scmp.eq.s32.totalorder %s16, 1
      %p60 = por %p58, %p59
      %p61 = scmp.ne.s32.totalorder %s50, %s51
      %p62 = scmp.eq.s32.totalorder %s16, 0
      %p63 = por %p61, %p62
      %p64 = scmp.ne.s32.totalorder %s50, %s51
      %p65 = scmp.eq.s32.totalorder %s17, 1
      %p66 = por %p64, %p65
      %p68 = scmp.ne.s32.totalorder %s51, %s67
      %p69 = scmp.eq.s32.totalorder %s17, 0
      %p70 = por %p68, %p69
      %s71 = ssub.s32 %s11, %s18
      %p72 = scmp.eq.s32.totalorder %s71, 0
      %s74 = sadd.s32 %s73, 1
      %s75 = scalar_select %p72, %s73, %s74
      %p78 = pneg %p72
      %p79 = scmp.eq.s32.totalorder %s11, 1
      %p80 = por %p78, %p79
      %p81 = scmp.ne.s32.totalorder %s73, %s76
      %p82 = scmp.eq.s32.totalorder %s11, 0
      %p83 = por %p81, %p82
      %p84 = scmp.ne.s32.totalorder %s73, %s76
      %p85 = scmp.eq.s32.totalorder %s16, 1
      %p86 = por %p84, %p85
      %p87 = scmp.ne.s32.totalorder %s76, %s77
      %p88 = scmp.eq.s32.totalorder %s16, 0
      %p89 = por %p87, %p88
      %p90 = scmp.ne.s32.totalorder %s76, %s77
      %p91 = scmp.eq.s32.totalorder %s17, 1
      %p92 = por %p90, %p91
      %p94 = scmp.ne.s32.totalorder %s77, %s93
      %p95 = scmp.eq.s32.totalorder %s17, 0
      %p96 = por %p94, %p95
      %p97 = scmp.le.s32.totalorder 1, %s11
      %p98 = scmp.lt.s32.totalorder %s11, 3
      %p99 = pnand %p97, %p98
      %p100 = pneg %p99
      // Predicated region
      $region9: #{tpu_custom_call.1} parent=5 // pred_check
        _
      $region10: #{tpu_custom_call.1} parent=5 // pred_check_branch
        %102 = sbr.rel (%p99) target = $region12
      $region11: #{tpu_custom_call.1} parent=5 // pred_region
        %s103 = ssub.s32 %s11, 1
      $region12: #{tpu_custom_call.1} parent=5 // pred_fallthru
        _
      %p104 = scmp.lt.s32.totalorder %s11, 2
      // Predicated region
      $region13: #{tpu_custom_call.1} parent=5 // pred_check
        %p105 = pneg %p104
      $region14: #{tpu_custom_call.1} parent=5 // pred_check_branch
        %107 = sbr.rel (%p105) target = $region16
      $region15: #{tpu_custom_call.1} parent=5 // pred_region
        // Predicated region
        $region17: #{tpu_custom_call.1} parent=15 // pred_check
          %p108 = pneg %p31
        $region18: #{tpu_custom_call.1} parent=15 // pred_check_branch
          %110 = sbr.rel (%p108) target = $region20
        $region19: #{tpu_custom_call.1} parent=15 // pred_region
          %p111 = scmp.lt.s32.totalorder %s11, 1
          %s112 = scalar_select %p111, %s11, 1
          %s113 = smul.addr %s112, 8
          %s114 = scalar_lea.vmem %s0, %s113
        $region20: #{tpu_custom_call.1} parent=15 // pred_fallthru
          _
        // Predicated region
        $region21: #{tpu_custom_call.1} parent=15 // pred_check
          %p115 = pneg %p57
        $region22: #{tpu_custom_call.1} parent=15 // pred_check_branch
          %117 = sbr.rel (%p115) target = $region24
        $region23: #{tpu_custom_call.1} parent=15 // pred_region
          %p118 = scmp.lt.s32.totalorder %s11, 1
          %s119 = scalar_select %p118, %s11, 1
          %s120 = smul.addr %s119, 8
          %s121 = scalar_lea.vmem %s1, %s120
        $region24: #{tpu_custom_call.1} parent=15 // pred_fallthru
          _
      $region16: #{tpu_custom_call.1} parent=5 // pred_fallthru
        _
      %p122 = scmp.le.s32.totalorder 1, %s11
      %p123 = scmp.lt.s32.totalorder %s11, 3
      %p124 = pnand %p122, %p123
      %p125 = pneg %p124
      // Predicated region
      $region25: #{tpu_custom_call.1} parent=5 // pred_check
        _
      $region26: #{tpu_custom_call.1} parent=5 // pred_check_branch
        %127 = sbr.rel (%p124) target = $region28
      $region27: #{tpu_custom_call.1} parent=5 // pred_region
        %s128 = ssub.s32 %s11, 1
        %p129 = scmp.lt.s32.totalorder %s16, 1
        %s130 = scalar_select %p129, %s16, 1
        %s131 = smul.addr %s130, 8
        %s132 = scalar_lea.vmem %s0, %s131
        %p133 = pneg %p37
        %p134 = pneg %p34
        %p135 = scmp.lt.s32.totalorder %s16, 1
        %s136 = scalar_select %p135, %s16, 1
        %s137 = smul.addr %s136, 8
        %s138 = scalar_lea.vmem %s1, %s137
        %p139 = pneg %p63
        %p140 = pneg %p60
        %p141 = pneg %p89
        %p142 = pneg %p86
        %s143 = sand.u32 %s76, 1
        %s144 = scalar_lea.sflag [#allocation3], %s143
        %s145 = sand.u32 %s76, 1
        %s146 = smul.addr %s145, 8
        %s147 = scalar_lea.vmem [#allocation2], %s146
        %p148 = scmp.lt.s32.totalorder %s16, 1
        %s149 = scalar_select %p148, %s16, 1
        %s150 = smul.addr %s149, 8
        %s151 = scalar_lea.vmem %s0, %s150
        %p152 = scmp.lt.s32.totalorder %s16, 1
        %s153 = scalar_select %p152, %s16, 1
        %s154 = smul.addr %s153, 8
        %s155 = scalar_lea.vmem %s1, %s154
        %v156 = vld [vmem:[%s151] sm:$0xff]
        %v157 = vld [vmem:[%s155] sm:$0xff]
        %v158 = vlaneseq
        %v159 = vand.u32 %v158, 127
        %vm160 = vcmask 261120
        %v161 = vsel %vm160, %v156, -inf
        %162 = vmax.xlane.f32.xlu0 %v161
        %v163 = vpop.xlane.xlu0 %162
        %v164 = vsub.f32 %v156, %v163
        %v165 = vmul.f32 %v164, 1.442695
        %v166 = vpow.pop %v165
        %v167 = vsel %vm160, %v166, 0.0
        %168 = vadd.xlane.f32.xlu0 %v167
        %v169 = vpop.xlane.xlu0 %168
        %v170 = vlog2.pop %v169
        %v171 = vmul.f32 %v170, 0.6931472
        %v172 = vadd.f32 %v163, %v171
        %v173 = vsel %vm160, %v156, 0.0
        %174 = vadd.xlane.f32.xlu0 %v173
        %v175 = vpop.xlane.xlu0 %174
        %176 = vset.pattern.permute.xlu0 0
        %177 = vperm.xlu0 %176, %v157
        %v178 = vpop.permute.xlu0 %177
        %vm179 = vcmp.eq.s32.totalorder %v159, %v178
        %v180 = vsel %vm179, %v156, 0.0
        %v181 = vsel %vm160, %v180, 0.0
        %182 = vadd.xlane.f32.xlu0 %v181
        %v183 = vpop.xlane.xlu0 %182
        %vm184 = vcmp.eq.s32.totalorder %v159, 0
        %v185 = vsel %vm184, 1, 0
        %vm186 = vcmp.eq.s32.totalorder %v185, 1
        %v187 = vsel %vm186, %v156, 0.0
        %v188 = vsel %vm160, %v187, 0.0
        %189 = vadd.xlane.f32.xlu0 %v188
        %v190 = vpop.xlane.xlu0 %189
        %v191 = vadd.f32 %v172, -0.66520274
        %v192 = vmul.f32 %v183, 0.89666665
        %v193 = vsub.f32 %v191, %v192
        %v194 = vmul.f32 %v175, 0.0033333334
        %v195 = vsub.f32 %v193, %v194
        %v196 = vmul.f32 %v190, 0.0033333334
        %v197 = vadd.f32 %v195, %v196
        %vm198 = vcmp.ne.s32.totalorder %v157, 0
        %v199 = vsel %vm198, %v197, 0.0
        %vm200 = vcmask 7168
        %v201 = vsel %vm200, %v199, 0.0
        %202 = vadd.xlane.f32.xlu0 %v201
        %v203 = vpop.xlane.xlu0 %202
        %v204 = vrot.slane %v203, 4
        %v205 = vadd.f32 %v203, %v204
        %v206 = vrot.slane %v205, 2
        %v207 = vadd.f32 %v205, %v206
        %v208 = vrot.slane %v207, 1
        %v209 = vadd.f32 %v207, %v208
        %s210 = vtos %v209
        %v211 = vsel %vm198, 1, 0
        %v212 = vcvt.s32.f32 %v211
        %v213 = vsel %vm200, %v212, 0.0
        %214 = vadd.xlane.f32.xlu0 %v213
        %v215 = vpop.xlane.xlu0 %214
        %v216 = vrot.slane %v215, 4
        %v217 = vadd.f32 %v215, %v216
        %v218 = vrot.slane %v217, 2
        %v219 = vadd.f32 %v217, %v218
        %v220 = vrot.slane %v219, 1
        %v221 = vadd.f32 %v219, %v220
        %s222 = vtos %v221
        %v223 = vlaneseq
        %v224 = vshrl.u32 %v223, 7
        %vm225 = vcmp.eq.s32.totalorder %v224, 0
        %vm226 = vcmp.eq.s32.totalorder %v224, 1
        %v227 = vstv %s222
        %v228 = vsel %vm226, %v227, 0.0
        %v229 = vstv %s210
        %v230 = vsel %vm225, %v229, %v228
        %231 = vst [vmem:[%s147] sm:$0xff] %v230
        %s232 = sand.u32 %s76, 1
        %s233 = scalar_lea.sflag [#allocation3], %s232
        %s234 = sand.u32 %s76, 1
        %s235 = smul.addr %s234, 8
        %s236 = scalar_lea.vmem [#allocation2], %s235
        // Predicated region
        $region29: #{tpu_custom_call.1} parent=27 // pred_check
          %p237 = pneg %p86
        $region30: #{tpu_custom_call.1} parent=27 // pred_check_branch
          %239 = sbr.rel (%p237) target = $region32
        $region31: #{tpu_custom_call.1} parent=27 // pred_region
          %241 = vsyncadd %s233, 0
          %s242 = smul.addr %s16, 8
          %s243 = scalar_lea.hbm %s2, %s242
          %s245 = sshll.u32 %s236, 4
          %s246 = int_to_ptr.vmem [resolvable:$true] %s245
          %s247 = sshll.u32 %s243, 4
          %s248 = int_to_ptr.hbm [resolvable:$true] %s247
          %250 = dma.vmem_to_hbm [thread:$0]  %s246, 128, %s248, %s233
        $region32: #{tpu_custom_call.1} parent=27 // pred_fallthru
          _
      $region28: #{tpu_custom_call.1} parent=5 // pred_fallthru
        _
      %p251 = scmp.le.s32.totalorder 2, %s11
      // Predicated region
      $region33: #{tpu_custom_call.1} parent=5 // pred_check
        %p252 = pneg %p251
      $region34: #{tpu_custom_call.1} parent=5 // pred_check_branch
        %254 = sbr.rel (%p252) target = $region36
      $region35: #{tpu_custom_call.1} parent=5 // pred_region
        %s255 = ssub.s32 %s11, 2
        // Predicated region
        $region37: #{tpu_custom_call.1} parent=35 // pred_check
          %p256 = pneg %p92
        $region38: #{tpu_custom_call.1} parent=35 // pred_check_branch
          %258 = sbr.rel (%p256) target = $region40
        $region39: #{tpu_custom_call.1} parent=35 // pred_region
          %s259 = sand.u32 %s77, 1
          %s260 = scalar_lea.sflag [#allocation3], %s259
          %s261 = sand.u32 %s77, 1
          %s262 = smul.addr %s261, 8
          %s263 = scalar_lea.vmem [#allocation2], %s262
          %265 = dma.done %s260, 128
        $region40: #{tpu_custom_call.1} parent=35 // pred_fallthru
          _
      $region36: #{tpu_custom_call.1} parent=5 // pred_fallthru
        _
    $region6: #{tpu_custom_call.1} parent=1 // loop_footer
      %s15 = sadd.s32 1, %s11
    $region7: #{tpu_custom_call.1} parent=1 // loop_footer_branch
      %10 = sbr.rel target = $region3
    $region8: #{tpu_custom_call.1} parent=1 // loop_exit
      _
    %266 = vsyncpa [#allocation3], 1
    %s267 = scalar_lea.sflag [#allocation3], 1
    %268 = vsyncpa %s267, 1

</llo_original>
